<compile_context>
chip_gen: v7x
topology: tpu7x:2x2x1
jax: 0.10.0
libtpu: 0.0.40
codegen_flags: <defaults>
</compile_context>

<pallas_src>
import functools

import jax
import jax.numpy as jnp
from jax.experimental import pallas as pl
from jax.experimental.pallas import tpu as pltpu


def _round_up(v, m):
    return -(-v // m) * m


def _fusion_kernel(*refs, n_feats, weighted, limits, block_cols):
    """out_block = (w0*)x_block + sum_i (wi*) feat_i_block.

    limits[i] is None for features spanning the full output width (equal or
    wider channel count — wider ones are implicitly truncated by the output
    block extent), or the feature's own column count for narrower features,
    in which case output columns >= limits[i] receive no contribution.
    """
    idx = 0
    w_ref = None
    if weighted:
        w_ref = refs[0]
        idx = 1
    x_ref = refs[idx]
    feat_refs = refs[idx + 1: idx + 1 + n_feats]
    out_ref = refs[idx + 1 + n_feats]

    acc = x_ref[...].astype(jnp.float32)
    if weighted:
        acc = acc * w_ref[0]

    col = None
    if any(l is not None for l in limits):
        j = pl.program_id(0)
        col = j * block_cols + jax.lax.broadcasted_iota(jnp.int32, x_ref.shape, 1)

    for i in range(n_feats):
        a = feat_refs[i][...].astype(jnp.float32)
        if weighted:
            a = a * w_ref[i + 1]
        if limits[i] is not None:
            a = jnp.where(col < limits[i], a, 0.0)
        acc = acc + a

    out_ref[...] = acc.astype(out_ref.dtype)


def _vmem_budgets():
    """Generation-aware (working-set budget, vmem_limit_bytes)."""
    try:
        cap = pltpu.get_tpu_info().vmem_capacity_bytes
    except Exception:
        cap = 64 << 20   # conservative: v7x per-TensorCore VMEM
    working = min(28 << 20, cap // 3)
    limit = min(64 << 20, max(cap // 2, working + (8 << 20)))
    return working, limit


def _choose_block_cols(mx, n_streams, batch, col_cap, budget_bytes):
    """Columns per block: lane-dense, VMEM-budgeted, >=4 grid steps if possible."""
    rows_pad = max(8, _round_up(batch, 8))         # sublane padding in VMEM
    per_col = 2 * n_streams * rows_pad * 4         # double-buffered f32 bytes / col
    bc = budget_bytes // per_col
    bc = min(bc, (4 << 20) // (rows_pad * 4))      # ~<=4 MiB per-stream block
    if mx >= 4 * 128:
        bc = min(bc, mx // 4)                      # >=4 steps -> pipeline + megacore
    bc = min(bc, col_cap, mx)
    return max(128, (bc // 128) * 128)


def _clamped_index_map(last_block):
    def index_map(j):
        return (0, jnp.minimum(j, last_block))
    return index_map


def _fused_call(x2, feats, w_sel, block_cols, grid_cols, alias_x, vmem_limit):
    batch, mx = x2.shape
    n_feats = len(feats)
    weighted = w_sel is not None
    limits = tuple(limit for (_, limit) in feats)

    col_spec = pl.BlockSpec((batch, block_cols), lambda j: (0, j))

    in_specs, args = [], []
    if weighted:
        in_specs.append(pl.BlockSpec(memory_space=pltpu.MemorySpace.SMEM))
        args.append(w_sel)
    in_specs.append(col_spec)
    args.append(x2)
    for a2, limit in feats:
        if limit is None:
            in_specs.append(col_spec)
        else:
            last = max(0, -(-limit // block_cols) - 1)
            in_specs.append(pl.BlockSpec((batch, block_cols),
                                         _clamped_index_map(last)))
        args.append(a2)

    kernel = functools.partial(_fusion_kernel, n_feats=n_feats, weighted=weighted,
                               limits=limits, block_cols=block_cols)
    io_aliases = {0: 0} if alias_x else {}

    return pl.pallas_call(
        kernel,
        out_shape=jax.ShapeDtypeStruct((batch, mx), x2.dtype),
        grid=(grid_cols,),
        in_specs=in_specs,
        out_specs=col_spec,
        input_output_aliases=io_aliases,
        compiler_params=pltpu.CompilerParams(
            dimension_semantics=("parallel",),
            vmem_limit_bytes=vmem_limit),
    )(*args)


def weighted_feature_fusion(x, outputs, layers, w=None):
    """Pallas implementation of WeightedFeatureFusion.forward.

    x:       (N, C, H, W) feature map
    outputs: list of (N, Ci, H, W) feature maps (indexed by `layers`)
    layers:  python list of (possibly negative) indices into `outputs`
    w:       (n,) raw learnable weights (pre-sigmoid), or None if weight=False
    """
    weighted = w is not None
    n = len(layers) + 1
    N, nx, H, W = x.shape
    hw = H * W
    mx = nx * hw

    w_eff = None
    if weighted:
        w_eff = jax.nn.sigmoid(w.astype(jnp.float32)) * (2.0 / n)

    lane_aligned = (mx % 128 == 0)

    kernel_feats = []   # (array (N, cols), col_limit_or_None)
    kernel_widx = []    # weight index per kernel feature
    epilogue = []       # (feature NCHW, weight index) handled with plain JAX

    for i in range(n - 1):
        a = outputs[layers[i]]
        na = a.shape[1]
        ma = na * hw
        if na >= nx:
            if lane_aligned:
                # Zero-copy wide/equal: the first mx columns of the (N, na*H*W)
                # reshape are exactly a[:, :nx]; columns beyond mx are never
                # used (last partial output block is masked).
                kernel_feats.append((a.reshape(N, ma), None))
            else:
                # TODO(synk): lane-misaligned mx pays one slice copy of a wide
                # stream; equal-width streams stay copy-free.
                aa = a if na == nx else a[:, :nx]
                kernel_feats.append((aa.reshape(N, mx), None))
            kernel_widx.append(i + 1)
        else:
            if lane_aligned and ma >= 128:
                kernel_feats.append((a.reshape(N, ma), ma))
                kernel_widx.append(i + 1)
            else:
                # TODO(synk): tiny / lane-misaligned narrow slabs use an XLA
                # scatter-add epilogue instead of a dedicated slab kernel.
                epilogue.append((a, i + 1))

    if not kernel_feats and not weighted:
        out = x                                     # pure pass-through
    else:
        working_budget, vmem_limit = _vmem_budgets()
        n_streams = len(kernel_feats) + 2           # x, features, out
        if lane_aligned:
            col_cap = min([l for _, l in kernel_feats if l is not None],
                          default=mx)
            block_cols = _choose_block_cols(mx, n_streams, N, col_cap,
                                            working_budget)
        else:
            block_cols = mx                         # full-extent block, grid=(1,)
            rows_pad = max(8, _round_up(N, 8))
            if 2 * n_streams * rows_pad * mx * 4 > vmem_limit:
                # TODO(synk): huge lane-misaligned maps: let XLA fuse the adds.
                return _reference(x, outputs, layers, w).astype(x.dtype)

        alias_x = ((not weighted) and len(kernel_feats) > 0
                   and all(l is not None for _, l in kernel_feats))
        if alias_x:
            # Narrow-only, unweighted: only touch the narrow column range;
            # untouched columns keep x via input/output aliasing.
            grid_cols = -(-max(l for _, l in kernel_feats) // block_cols)
        else:
            grid_cols = -(-mx // block_cols)

        w_sel = None
        if weighted:
            w_sel = jnp.take(w_eff, jnp.asarray([0] + kernel_widx, jnp.int32))

        out2 = _fused_call(x.reshape(N, mx), kernel_feats, w_sel,
                           block_cols, grid_cols, alias_x, vmem_limit)
        out = out2.reshape(N, nx, H, W)

    for a, widx in epilogue:
        na = a.shape[1]
        contrib = a * w_eff[widx] if weighted else a
        out = out.at[:, :na].add(contrib.astype(out.dtype))

    return out


def _reference(x, outputs, layers, w=None):
    """Pure-JAX port of the PyTorch forward (verification / rare fallback)."""
    n = len(layers) + 1
    weighted = w is not None
    if weighted:
        we = jax.nn.sigmoid(w) * (2.0 / n)
        x = x * we[0]
    nx = x.shape[1]
    for i in range(n - 1):
        a = outputs[layers[i]]
        if weighted:
            a = a * we[i + 1]
        na = a.shape[1]
        if nx == na:
            x = x + a
        elif nx > na:
            x = x.at[:, :na].add(a)
        else:
            x = x + a[:, :nx]
    return x


if __name__ == "__main__":
    key = jax.random.PRNGKey(0)
    k1, k2, k3, k4, k5, k6, k7, k8 = jax.random.split(key, 8)

    # --- Test 1: weighted fusion, equal + narrow channel counts.
    layers1 = [-2, -3]
    x1 = jax.random.normal(k1, (2, 4, 16, 16), jnp.float32)
    outs1 = [
        jax.random.normal(k2, (2, 2, 16, 16), jnp.float32),   # -3 (narrow)
        jax.random.normal(k3, (2, 4, 16, 16), jnp.float32),   # -2 (equal)
        jax.random.normal(k4, (2, 4, 16, 16), jnp.float32),   # -1 (unused)
    ]
    w1 = jnp.zeros((len(layers1) + 1,), jnp.float32)
    o1 = jax.block_until_ready(weighted_feature_fusion(x1, outs1, layers1, w1))
    r1 = _reference(x1, outs1, layers1, w1)
    assert o1.shape == r1.shape == x1.shape
    assert jnp.allclose(o1, r1, atol=1e-5, rtol=1e-5)

    # --- Test 2: unweighted, wider source (na > nx), lane-misaligned mx.
    layers2 = [-1]
    x2 = jax.random.normal(k5, (2, 3, 5, 7), jnp.float32)
    outs2 = [jax.random.normal(k6, (2, 6, 5, 7), jnp.float32)]
    o2 = jax.block_until_ready(weighted_feature_fusion(x2, outs2, layers2, None))
    r2 = _reference(x2, outs2, layers2, None)
    assert o2.shape == r2.shape == x2.shape
    assert jnp.allclose(o2, r2, atol=1e-5, rtol=1e-5)

    # --- Test 3: unweighted, narrow-only (aliased, slab-only grid).
    layers3 = [-1]
    x3 = jax.random.normal(k7, (2, 4, 16, 16), jnp.float32)
    outs3 = [jax.random.normal(k8, (2, 2, 16, 16), jnp.float32)]
    o3 = jax.block_until_ready(weighted_feature_fusion(x3, outs3, layers3, None))
    r3 = _reference(x3, outs3, layers3, None)
    assert jnp.allclose(o3, r3, atol=1e-5, rtol=1e-5)

    # --- Test 4: weighted, wider source, lane-aligned (zero-copy wide path).
    layers4 = [-1]
    x4 = jax.random.normal(k2, (2, 4, 16, 16), jnp.float32)
    outs4 = [jax.random.normal(k3, (2, 6, 16, 16), jnp.float32)]
    w4 = 0.1 * jax.random.normal(k4, (len(layers4) + 1,), jnp.float32)
    o4 = jax.block_until_ready(weighted_feature_fusion(x4, outs4, layers4, w4))
    r4 = _reference(x4, outs4, layers4, w4)
    assert jnp.allclose(o4, r4, atol=1e-5, rtol=1e-5)

    print("KERNEL_OK")
</pallas_src>

<mosaic_0001>
module attributes {stable_mosaic.version = 11 : i64} {
  func.func @_fusion_kernel(%arg0: i32, %arg1: memref<3xf32, #tpu.memory_space<smem>>, %arg2: memref<2x256xf32, #tpu.memory_space<vmem>>, %arg3: memref<2x256xf32, #tpu.memory_space<vmem>>, %arg4: memref<2x256xf32, #tpu.memory_space<vmem>>, %arg5: memref<2x256xf32, #tpu.memory_space<vmem>>) attributes {dimension_semantics = [#tpu.dimension_semantics<parallel>], iteration_bounds = array<i64: 4>, scalar_prefetch = 0 : i64, scratch_operands = 0 : i64, tpu.core_type = #tpu.core_type<tc>, window_params = [{transform_indices = @transform_0, window_bounds = array<i64: 3>}, {transform_indices = @transform_1, window_bounds = array<i64: 2, 256>}, {transform_indices = @transform_2, window_bounds = array<i64: 2, 256>}, {transform_indices = @transform_3, window_bounds = array<i64: 2, 256>}, {transform_indices = @transform_4, window_bounds = array<i64: 2, 256>}]} {
    %c0 = arith.constant 0 : index
    %c0_0 = arith.constant 0 : index
    %0 = vector.load %arg2[%c0, %c0_0] : memref<2x256xf32, #tpu.memory_space<vmem>>, vector<2x256xf32>
    %c0_1 = arith.constant 0 : index
    %1 = memref.load %arg1[%c0_1] : memref<3xf32, #tpu.memory_space<smem>>
    %2 = vector.broadcast %1 : f32 to vector<2x256xf32>
    %3 = arith.mulf %0, %2 : vector<2x256xf32>
    %c256_i32 = arith.constant 256 : i32
    %4 = arith.muli %arg0, %c256_i32 : i32
    %5 = tpu.iota {dimensions = array<i32: 1>} : vector<2x256xi32>
    %6 = vector.broadcast %4 : i32 to vector<2x256xi32>
    %7 = arith.addi %6, %5 : vector<2x256xi32>
    %c0_2 = arith.constant 0 : index
    %c0_3 = arith.constant 0 : index
    %8 = vector.load %arg3[%c0_2, %c0_3] : memref<2x256xf32, #tpu.memory_space<vmem>>, vector<2x256xf32>
    %c1 = arith.constant 1 : index
    %9 = memref.load %arg1[%c1] : memref<3xf32, #tpu.memory_space<smem>>
    %10 = vector.broadcast %9 : f32 to vector<2x256xf32>
    %11 = arith.mulf %8, %10 : vector<2x256xf32>
    %12 = arith.addf %3, %11 : vector<2x256xf32>
    %c0_4 = arith.constant 0 : index
    %c0_5 = arith.constant 0 : index
    %13 = vector.load %arg4[%c0_4, %c0_5] : memref<2x256xf32, #tpu.memory_space<vmem>>, vector<2x256xf32>
    %c2 = arith.constant 2 : index
    %14 = memref.load %arg1[%c2] : memref<3xf32, #tpu.memory_space<smem>>
    %15 = vector.broadcast %14 : f32 to vector<2x256xf32>
    %16 = arith.mulf %13, %15 : vector<2x256xf32>
    %c512_i32 = arith.constant 512 : i32
    %17 = vector.broadcast %c512_i32 : i32 to vector<2x256xi32>
    %18 = arith.cmpi slt, %7, %17 : vector<2x256xi32>
    %cst = arith.constant 0.000000e+00 : f32
    %19 = vector.broadcast %cst : f32 to vector<2x256xf32>
    %20 = arith.select %18, %16, %19 : vector<2x256xi1>, vector<2x256xf32>
    %21 = arith.addf %12, %20 : vector<2x256xf32>
    %c0_6 = arith.constant 0 : index
    %c0_7 = arith.constant 0 : index
    %22 = vector.load %arg5[%c0_6, %c0_7] : memref<2x256xf32, #tpu.memory_space<vmem>>, vector<2x256xf32>
    tpu.vector_store %arg5[%c0_6, %c0_7], %21 {strides = array<i32>} : memref<2x256xf32, #tpu.memory_space<vmem>>, vector<2x256xf32>,
    return
  }
  func.func @transform_0(%arg0: i32) -> i32 {
    %c0_i32 = arith.constant 0 : i32
    %c0_i32_0 = arith.constant 0 : i32
    return %c0_i32 : i32
  }
  func.func @transform_1(%arg0: i32) -> (i32, i32) {
    %c0_i32 = arith.constant 0 : i32
    %c0_i32_0 = arith.constant 0 : i32
    return %c0_i32, %arg0 : i32, i32
  }
  func.func @transform_2(%arg0: i32) -> (i32, i32) {
    %c0_i32 = arith.constant 0 : i32
    %c0_i32_0 = arith.constant 0 : i32
    return %c0_i32, %arg0 : i32, i32
  }
  func.func @transform_3(%arg0: i32) -> (i32, i32) {
    %c1_i32 = arith.constant 1 : i32
    %0 = arith.minsi %arg0, %c1_i32 : i32
    %c0_i32 = arith.constant 0 : i32
    %c0_i32_0 = arith.constant 0 : i32
    return %c0_i32, %0 : i32, i32
  }
  func.func @transform_4(%arg0: i32) -> (i32, i32) {
    %c0_i32 = arith.constant 0 : i32
    %c0_i32_0 = arith.constant 0 : i32
    return %c0_i32, %arg0 : i32, i32
  }
}

</mosaic_0001>

<llo_original>
// kernel: tpu_custom_call.1
$region0: #{tpu_custom_call.1}
  #allocation0 [shape = 'u32[]', space=smem, size = 0x4, offset = 0x4, fixed_abs, tag = 'smem constant byte address 0x4 - core index']
  #allocation1 [shape = 'u32[144,128]{1,0:T(1,128)}', space=vmem, size = 0x12000, scoped, tag = 'internal scratch']
  %s0 = inlined_call_operand.hbm [shape: f32[3], index: 0, kind: input, shape index: {}]
  %s1 = inlined_call_operand.hbm [shape: f32[2,1024], index: 1, kind: input, shape index: {}]
  %s2 = inlined_call_operand.hbm [shape: f32[2,1024], index: 2, kind: input, shape index: {}]
  %s3 = inlined_call_operand.vmem [shape: f32[2,512], index: 3, kind: input, shape index: {}]
  %s4 = inlined_call_operand.hbm [shape: f32[2,1024], index: 4, kind: output, shape index: {}]
  %s5 = sld [smem:[#allocation0]]
  $region61: #{tpu_custom_call.1} parent=0
    _
  %s7 = ssub.s32 1, %s5
  %s8 = scalar_select 0, %s7, %s5
  $region1: #{tpu_custom_call.1} parent=0
    #allocation2 [shape = 'u8[512]{0}', space=smem, size = 0x200, scoped, tag = 'input window, operand 0, single buffered']
    #allocation3 [shape = 's32[2]{0}', space=sflag, size = 0x8, scoped, tag = 'scoped memory for tpu_custom_call.1']
    #allocation4 [shape = 's32[2]{0}', space=sflag, size = 0x8, scoped, tag = 'scoped memory for tpu_custom_call.1']
    #allocation5 [shape = 's32[2]{0}', space=sflag, size = 0x8, scoped, tag = 'scoped memory for tpu_custom_call.1']
    #allocation6 [shape = 'u8[4096]{0}', space=vmem, size = 0x1000, scoped, tag = 'input window, operand 1']
    #allocation7 [shape = 'u8[4096]{0}', space=vmem, size = 0x1000, scoped, tag = 'input window, operand 2']
    #allocation8 [shape = 's32[2]{0}', space=sflag, size = 0x8, scoped, tag = 'scoped memory for tpu_custom_call.1']
    #allocation9 [shape = 'u8[4096]{0}', space=vmem, size = 0x1000, scoped, tag = 'output window, operand 0']
    %9 = vsyncpa [#allocation5], 0
    %10 = vsyncpa [#allocation3], 0
    %s11 = scalar_lea.sflag [#allocation3], 1
    %12 = vsyncpa %s11, 0
    %13 = vsyncpa [#allocation8], 0
    %s14 = scalar_lea.sflag [#allocation8], 1
    %15 = vsyncpa %s14, 0
    %16 = vsyncpa [#allocation4], 0
    %s17 = scalar_lea.sflag [#allocation4], 1
    %18 = vsyncpa %s17, 0
    loop: start=0, step=1, limit=6
    $region2: #{tpu_custom_call.1} parent=1 // loop_pre_header
      _
    $region3: #{tpu_custom_call.1} parent=1 // loop_header
      %s20 = sphi 0, %s24
      %p21 = scmp.ge.s32.totalorder %s20, 6
      %s28 = sphi 0, %s28
      %s30 = sphi 0, %s28
      %s31 = sphi 0, %s30
      %s45 = sphi 0, %s31
      %s51 = sphi 0, %s53
      %s54 = sphi 0, %s51
      %s55 = sphi 0, %s54
      %s71 = sphi 0, %s55
      %s77 = sphi 0, %s79
      %s80 = sphi 0, %s77
      %s81 = sphi 0, %s80
      %s97 = sphi 0, %s81
      %s107 = sphi 0, %s109
      %s110 = sphi 0, %s107
      %s111 = sphi 0, %s110
      %s127 = sphi 0, %s111
      %s133 = sphi 0, %s135
      %s136 = sphi 0, %s133
      %s137 = sphi 0, %s136
      %s153 = sphi 0, %s137
    $region4: #{tpu_custom_call.1} parent=1 // loop_header_branch
      %23 = sbr.rel (%p21) target = $region8
    $region5: #{tpu_custom_call.1} parent=1 // loop_body
      %s25 = ssub.s32 %s20, 1
      %s26 = ssub.s32 %s20, 2
      %s27 = sadd.s32 %s20, 1
      %s29 = sadd.s32 %s28, 1
      %p32 = scmp.eq.s32.totalorder %s20, 3
      %p33 = scmp.ne.s32.totalorder %s28, %s30
      %p34 = scmp.eq.s32.totalorder %s20, 0
      %p35 = por %p33, %p34
      %p36 = scmp.ne.s32.totalorder %s28, %s30
      %p37 = scmp.eq.s32.totalorder %s25, 3
      %p38 = por %p36, %p37
      %p39 = scmp.ne.s32.totalorder %s30, %s31
      %p40 = scmp.eq.s32.totalorder %s25, 0
      %p41 = por %p39, %p40
      %p42 = scmp.ne.s32.totalorder %s30, %s31
      %p43 = scmp.eq.s32.totalorder %s26, 3
      %p44 = por %p42, %p43
      %p46 = scmp.ne.s32.totalorder %s31, %s45
      %p47 = scmp.eq.s32.totalorder %s26, 0
      %p48 = por %p46, %p47
      %s49 = ssub.s32 %s20, %s27
      %p50 = scmp.eq.s32.totalorder %s49, 0
      %s52 = sadd.s32 %s51, 1
      %s53 = scalar_select %p50, %s51, %s52
      %p56 = pneg %p50
      %p57 = scmp.eq.s32.totalorder %s20, 3
      %p58 = por %p56, %p57
      %p59 = scmp.ne.s32.totalorder %s51, %s54
      %p60 = scmp.eq.s32.totalorder %s20, 0
      %p61 = por %p59, %p60
      %p62 = scmp.ne.s32.totalorder %s51, %s54
      %p63 = scmp.eq.s32.totalorder %s25, 3
      %p64 = por %p62, %p63
      %p65 = scmp.ne.s32.totalorder %s54, %s55
      %p66 = scmp.eq.s32.totalorder %s25, 0
      %p67 = por %p65, %p66
      %p68 = scmp.ne.s32.totalorder %s54, %s55
      %p69 = scmp.eq.s32.totalorder %s26, 3
      %p70 = por %p68, %p69
      %p72 = scmp.ne.s32.totalorder %s55, %s71
      %p73 = scmp.eq.s32.totalorder %s26, 0
      %p74 = por %p72, %p73
      %s75 = ssub.s32 %s20, %s27
      %p76 = scmp.eq.s32.totalorder %s75, 0
      %s78 = sadd.s32 %s77, 1
      %s79 = scalar_select %p76, %s77, %s78
      %p82 = pneg %p76
      %p83 = scmp.eq.s32.totalorder %s20, 3
      %p84 = por %p82, %p83
      %p85 = scmp.ne.s32.totalorder %s77, %s80
      %p86 = scmp.eq.s32.totalorder %s20, 0
      %p87 = por %p85, %p86
      %p88 = scmp.ne.s32.totalorder %s77, %s80
      %p89 = scmp.eq.s32.totalorder %s25, 3
      %p90 = por %p88, %p89
      %p91 = scmp.ne.s32.totalorder %s80, %s81
      %p92 = scmp.eq.s32.totalorder %s25, 0
      %p93 = por %p91, %p92
      %p94 = scmp.ne.s32.totalorder %s80, %s81
      %p95 = scmp.eq.s32.totalorder %s26, 3
      %p96 = por %p94, %p95
      %p98 = scmp.ne.s32.totalorder %s81, %s97
      %p99 = scmp.eq.s32.totalorder %s26, 0
      %p100 = por %p98, %p99
      %p101 = scmp.lt.s32.totalorder %s20, 1
      %s102 = scalar_select %p101, %s20, 1
      %p103 = scmp.lt.s32.totalorder %s27, 1
      %s104 = scalar_select %p103, %s27, 1
      %s105 = ssub.s32 %s102, %s104
      %p106 = scmp.eq.s32.totalorder %s105, 0
      %s108 = sadd.s32 %s107, 1
      %s109 = scalar_select %p106, %s107, %s108
      %p112 = pneg %p106
      %p113 = scmp.eq.s32.totalorder %s20, 3
      %p114 = por %p112, %p113
      %p115 = scmp.ne.s32.totalorder %s107, %s110
      %p116 = scmp.eq.s32.totalorder %s20, 0
      %p117 = por %p115, %p116
      %p118 = scmp.ne.s32.totalorder %s107, %s110
      %p119 = scmp.eq.s32.totalorder %s25, 3
      %p120 = por %p118, %p119
      %p121 = scmp.ne.s32.totalorder %s110, %s111
      %p122 = scmp.eq.s32.totalorder %s25, 0
      %p123 = por %p121, %p122
      %p124 = scmp.ne.s32.totalorder %s110, %s111
      %p125 = scmp.eq.s32.totalorder %s26, 3
      %p126 = por %p124, %p125
      %p128 = scmp.ne.s32.totalorder %s111, %s127
      %p129 = scmp.eq.s32.totalorder %s26, 0
      %p130 = por %p128, %p129
      %s131 = ssub.s32 %s20, %s27
      %p132 = scmp.eq.s32.totalorder %s131, 0
      %s134 = sadd.s32 %s133, 1
      %s135 = scalar_select %p132, %s133, %s134
      %p138 = pneg %p132
      %p139 = scmp.eq.s32.totalorder %s20, 3
      %p140 = por %p138, %p139
      %p141 = scmp.ne.s32.totalorder %s133, %s136
      %p142 = scmp.eq.s32.totalorder %s20, 0
      %p143 = por %p141, %p142
      %p144 = scmp.ne.s32.totalorder %s133, %s136
      %p145 = scmp.eq.s32.totalorder %s25, 3
      %p146 = por %p144, %p145
      %p147 = scmp.ne.s32.totalorder %s136, %s137
      %p148 = scmp.eq.s32.totalorder %s25, 0
      %p149 = por %p147, %p148
      %p150 = scmp.ne.s32.totalorder %s136, %s137
      %p151 = scmp.eq.s32.totalorder %s26, 3
      %p152 = por %p150, %p151
      %p154 = scmp.ne.s32.totalorder %s137, %s153
      %p155 = scmp.eq.s32.totalorder %s26, 0
      %p156 = por %p154, %p155
      %p157 = scmp.le.s32.totalorder 1, %s20
      %p158 = scmp.lt.s32.totalorder %s20, 5
      %p159 = pnand %p157, %p158
      %p160 = pneg %p159
      // Predicated region
      $region9: #{tpu_custom_call.1} parent=5 // pred_check
        _
      $region10: #{tpu_custom_call.1} parent=5 // pred_check_branch
        %162 = sbr.rel (%p159) target = $region12
      $region11: #{tpu_custom_call.1} parent=5 // pred_region
        %s163 = ssub.s32 %s20, 1
        // Predicated region
        $region13: #{tpu_custom_call.1} parent=11 // pred_check
          %p164 = pneg %p41
        $region14: #{tpu_custom_call.1} parent=11 // pred_check_branch
          %166 = sbr.rel (%p164) target = $region16
        $region15: #{tpu_custom_call.1} parent=11 // pred_region
          %s168 = ssub.s32 16, 16
          %169 = vsyncadd [#allocation5], %s168
          %172 = dma.hbm_to_smem %s0, 16, [#allocation2], [#allocation5]
        $region16: #{tpu_custom_call.1} parent=11 // pred_fallthru
          _
      $region12: #{tpu_custom_call.1} parent=5 // pred_fallthru
        _
      %p173 = scmp.lt.s32.totalorder %s20, 4
      // Predicated region
      $region17: #{tpu_custom_call.1} parent=5 // pred_check
        %p174 = pneg %p173
      $region18: #{tpu_custom_call.1} parent=5 // pred_check_branch
        %176 = sbr.rel (%p174) target = $region20
      $region19: #{tpu_custom_call.1} parent=5 // pred_region
        // Predicated region
        $region21: #{tpu_custom_call.1} parent=19 // pred_check
          %p177 = pneg %p61
        $region22: #{tpu_custom_call.1} parent=19 // pred_check_branch
          %179 = sbr.rel (%p177) target = $region24
        $region23: #{tpu_custom_call.1} parent=19 // pred_region
          %s180 = sand.u32 %s51, 1
          %s181 = scalar_lea.sflag [#allocation3], %s180
          %s182 = sand.u32 %s51, 1
          %s183 = smul.addr %s182, 4
          %s184 = scalar_lea.vmem [#allocation6], %s183
          %s185 = smul.u32 2, %s20
          %s187 = ssub.s32 64, 64
          %188 = vsyncadd %s181, %s187
          %s189 = smul.addr %s185, 32
          %s190 = scalar_lea.hbm %s1, %s189
          %s192 = sshll.u32 %s184, 4
          %s193 = int_to_ptr.vmem [resolvable:$true] %s192
          %195 = dma.hbm_to_vmem [thread:$0]  %s190, 64, %s193, %s181
        $region24: #{tpu_custom_call.1} parent=19 // pred_fallthru
          _
        // Predicated region
        $region25: #{tpu_custom_call.1} parent=19 // pred_check
          %p196 = pneg %p87
        $region26: #{tpu_custom_call.1} parent=19 // pred_check_branch
          %198 = sbr.rel (%p196) target = $region28
        $region27: #{tpu_custom_call.1} parent=19 // pred_region
          %s199 = sand.u32 %s77, 1
          %s200 = scalar_lea.sflag [#allocation8], %s199
          %s201 = sand.u32 %s77, 1
          %s202 = smul.addr %s201, 4
          %s203 = scalar_lea.vmem [#allocation7], %s202
          %s204 = smul.u32 2, %s20
          %s206 = ssub.s32 64, 64
          %207 = vsyncadd %s200, %s206
          %s208 = smul.addr %s204, 32
          %s209 = scalar_lea.hbm %s2, %s208
          %s211 = sshll.u32 %s203, 4
          %s212 = int_to_ptr.vmem [resolvable:$true] %s211
          %214 = dma.hbm_to_vmem [thread:$0]  %s209, 64, %s212, %s200
        $region28: #{tpu_custom_call.1} parent=19 // pred_fallthru
          _
        // Predicated region
        $region29: #{tpu_custom_call.1} parent=19 // pred_check
          %p215 = pneg %p117
        $region30: #{tpu_custom_call.1} parent=19 // pred_check_branch
          %217 = sbr.rel (%p215) target = $region32
        $region31: #{tpu_custom_call.1} parent=19 // pred_region
          %p218 = scmp.lt.s32.totalorder %s20, 1
          %s219 = scalar_select %p218, %s20, 1
          %s220 = smul.u32 2, %s219
          %p221 = scmp.lt.s32.totalorder %s220, 3
          %s222 = scalar_select %p221, %s220, 3
          %s223 = smul.addr %s222, 2
          %s224 = scalar_lea.vmem %s3, %s223
          %p225 = scmp.lt.s32.totalorder %s20, 1
          %s226 = scalar_select %p225, %s20, 1
          %s227 = smul.u32 2, %s226
        $region32: #{tpu_custom_call.1} parent=19 // pred_fallthru
          _
      $region20: #{tpu_custom_call.1} parent=5 // pred_fallthru
        _
      %p228 = scmp.le.s32.totalorder 1, %s20
      %p229 = scmp.lt.s32.totalorder %s20, 5
      %p230 = pnand %p228, %p229
      %p231 = pneg %p230
      // Predicated region
      $region33: #{tpu_custom_call.1} parent=5 // pred_check
        _
      $region34: #{tpu_custom_call.1} parent=5 // pred_check_branch
        %233 = sbr.rel (%p230) target = $region36
      $region35: #{tpu_custom_call.1} parent=5 // pred_region
        %s234 = ssub.s32 %s20, 1
        // Predicated region
        $region37: #{tpu_custom_call.1} parent=35 // pred_check
          %p235 = pneg %p41
        $region38: #{tpu_custom_call.1} parent=35 // pred_check_branch
          %237 = sbr.rel (%p235) target = $region40
        $region39: #{tpu_custom_call.1} parent=35 // pred_region
          %238 = dma.done [#allocation5], 16
        $region40: #{tpu_custom_call.1} parent=35 // pred_fallthru
          _
        %s239 = sand.u32 %s54, 1
        %s240 = scalar_lea.sflag [#allocation3], %s239
        %s241 = sand.u32 %s54, 1
        %s242 = smul.addr %s241, 4
        %s243 = scalar_lea.vmem [#allocation6], %s242
        // Predicated region
        $region41: #{tpu_custom_call.1} parent=35 // pred_check
          %p244 = pneg %p67
        $region42: #{tpu_custom_call.1} parent=35 // pred_check_branch
          %246 = sbr.rel (%p244) target = $region44
        $region43: #{tpu_custom_call.1} parent=35 // pred_region
          %247 = dma.done %s240, 64
        $region44: #{tpu_custom_call.1} parent=35 // pred_fallthru
          _
        %s248 = sand.u32 %s80, 1
        %s249 = scalar_lea.sflag [#allocation8], %s248
        %s250 = sand.u32 %s80, 1
        %s251 = smul.addr %s250, 4
        %s252 = scalar_lea.vmem [#allocation7], %s251
        // Predicated region
        $region45: #{tpu_custom_call.1} parent=35 // pred_check
          %p253 = pneg %p93
        $region46: #{tpu_custom_call.1} parent=35 // pred_check_branch
          %255 = sbr.rel (%p253) target = $region48
        $region47: #{tpu_custom_call.1} parent=35 // pred_region
          %256 = dma.done %s249, 64
        $region48: #{tpu_custom_call.1} parent=35 // pred_fallthru
          _
        %257 = sfence
        %p258 = pneg %p41
        %p259 = pneg %p38
        %s260 = sand.u32 %s54, 1
        %s261 = scalar_lea.sflag [#allocation3], %s260
        %s262 = sand.u32 %s54, 1
        %s263 = smul.addr %s262, 4
        %s264 = scalar_lea.vmem [#allocation6], %s263
        %p265 = pneg %p67
        %p266 = pneg %p64
        %s267 = sand.u32 %s80, 1
        %s268 = scalar_lea.sflag [#allocation8], %s267
        %s269 = sand.u32 %s80, 1
        %s270 = smul.addr %s269, 4
        %s271 = scalar_lea.vmem [#allocation7], %s270
        %p272 = pneg %p93
        %p273 = pneg %p90
        %p274 = scmp.lt.s32.totalorder %s25, 1
        %s275 = scalar_select %p274, %s25, 1
        %s276 = smul.u32 2, %s275
        %p277 = scmp.lt.s32.totalorder %s276, 3
        %s278 = scalar_select %p277, %s276, 3
        %s279 = smul.addr %s278, 2
        %s280 = scalar_lea.vmem %s3, %s279
        %p281 = pneg %p123
        %p282 = pneg %p120
        %p283 = pneg %p149
        %p284 = pneg %p146
        %s285 = sand.u32 %s136, 1
        %s286 = scalar_lea.sflag [#allocation4], %s285
        %s287 = sand.u32 %s136, 1
        %s288 = smul.addr %s287, 4
        %s289 = scalar_lea.vmem [#allocation9], %s288
        %s290 = smul.u32 2, %s25
        %s291 = smul.u32 2, %s25
        %p292 = scmp.lt.s32.totalorder %s25, 1
        %s293 = scalar_select %p292, %s25, 1
        %s294 = smul.u32 2, %s293
        %p295 = scmp.lt.s32.totalorder %s294, 3
        %s296 = scalar_select %p295, %s294, 3
        %s297 = smul.addr %s296, 2
        %s298 = scalar_lea.vmem %s3, %s297
        %p299 = scmp.lt.s32.totalorder %s25, 1
        %s300 = scalar_select %p299, %s25, 1
        %s301 = smul.u32 2, %s300
        %s302 = smul.u32 2, %s25
        %v303 = vld [vmem:[%s243] sm:$0xf]
        %s304 = sld [smem:[#allocation2]]
        %v305 = vstv %s304
        %v306 = vmul.f32 %v303, %v305
        %s307 = smul.u32 %s25, 256
        %v308 = vlaneseq
        %v309 = vand.u32 %v308, 127
        %v310 = vadd.s32 %v309, 128
        %v311 = vstv %s307
        %v312 = vadd.s32 %v311, %v309
        %v313 = vadd.s32 %v311, %v310
        %v314 = vld [vmem:[%s252] sm:$0xf]
        %s315 = sld [smem:[#allocation2 + $0x1]]
        %v316 = vstv %s315
        %v317 = vmul.f32 %v314, %v316
        %v318 = vadd.f32 %v306, %v317
        %v319 = vld [vmem:[%s298] sm:$0xf]
        %s320 = sld [smem:[#allocation2 + $0x2]]
        %v321 = vstv %s320
        %v322 = vmul.f32 %v319, %v321
        %vm323 = vcmp.lt.s32.totalorder %v312, 512
        %vm324 = vcmp.lt.s32.totalorder %v313, 512
        %v327 = vunpack.c.l.s4 1983009808
        %v328 = vunpack.c.0.s8 %v327
        %v329 = vlaneseq
        %v330 = vshrl.u32 %v329, 7
        %v331 = vsub.s32 %v328, %v330
        %v332 = vrot.slane %v322, %v331
        %v333 = vcombine.high %v332, %v332
        %v336 = vsel %vm323, %v332, 0.0
        %v337 = vsel %vm324, %v333, 0.0
        %v340 = vcombine.low %v336, %v337
        %v342 = vunpack.c.l.s4 1983009808
        %v343 = vunpack.c.0.s8 %v342
        %v344 = vlaneseq
        %v345 = vshrl.u32 %v344, 7
        %v346 = vsub.s32 %v343, %v345
        %v347 = vrot.slane %v340, %v346
        %v349 = vadd.f32 %v318, %v347
        %350 = vst [vmem:[%s289] sm:$0xf] %v349
        %s351 = sand.u32 %s136, 1
        %s352 = scalar_lea.sflag [#allocation4], %s351
        %s353 = sand.u32 %s136, 1
        %s354 = smul.addr %s353, 4
        %s355 = scalar_lea.vmem [#allocation9], %s354
        // Predicated region
        $region49: #{tpu_custom_call.1} parent=35 // pred_check
          %p356 = pneg %p146
        $region50: #{tpu_custom_call.1} parent=35 // pred_check_branch
          %358 = sbr.rel (%p356) target = $region52
        $region51: #{tpu_custom_call.1} parent=35 // pred_region
          %s359 = smul.u32 2, %s25
          %s361 = ssub.s32 64, 64
          %362 = vsyncadd %s352, %s361
          %s363 = smul.addr %s359, 32
          %s364 = scalar_lea.hbm %s4, %s363
          %s366 = sshll.u32 %s355, 4
          %s367 = int_to_ptr.vmem [resolvable:$true] %s366
          %369 = dma.vmem_to_hbm [thread:$0]  %s367, 64, %s364, %s352
        $region52: #{tpu_custom_call.1} parent=35 // pred_fallthru
          _
      $region36: #{tpu_custom_call.1} parent=5 // pred_fallthru
        _
      %p370 = scmp.le.s32.totalorder 2, %s20
      // Predicated region
      $region53: #{tpu_custom_call.1} parent=5 // pred_check
        %p371 = pneg %p370
      $region54: #{tpu_custom_call.1} parent=5 // pred_check_branch
        %373 = sbr.rel (%p371) target = $region56
      $region55: #{tpu_custom_call.1} parent=5 // pred_region
        %s374 = ssub.s32 %s20, 2
        // Predicated region
        $region57: #{tpu_custom_call.1} parent=55 // pred_check
          %p375 = pneg %p152
        $region58: #{tpu_custom_call.1} parent=55 // pred_check_branch
          %377 = sbr.rel (%p375) target = $region60
        $region59: #{tpu_custom_call.1} parent=55 // pred_region
          %s378 = sand.u32 %s137, 1
          %s379 = scalar_lea.sflag [#allocation4], %s378
          %s380 = sand.u32 %s137, 1
          %s381 = smul.addr %s380, 4
          %s382 = scalar_lea.vmem [#allocation9], %s381
          %383 = dma.done %s379, 64
        $region60: #{tpu_custom_call.1} parent=55 // pred_fallthru
          _
      $region56: #{tpu_custom_call.1} parent=5 // pred_fallthru
        _
    $region6: #{tpu_custom_call.1} parent=1 // loop_footer
      %s24 = sadd.s32 1, %s20
    $region7: #{tpu_custom_call.1} parent=1 // loop_footer_branch
      %19 = sbr.rel target = $region3
    $region8: #{tpu_custom_call.1} parent=1 // loop_exit
      _
    %384 = vsyncpa [#allocation3], 1
    %s385 = scalar_lea.sflag [#allocation3], 1
    %386 = vsyncpa %s385, 1
    %387 = vsyncpa [#allocation8], 1
    %s388 = scalar_lea.sflag [#allocation8], 1
    %389 = vsyncpa %s388, 1
    %390 = vsyncpa [#allocation4], 1
    %s391 = scalar_lea.sflag [#allocation4], 1
    %392 = vsyncpa %s391, 1
    %393 = vsyncpa [#allocation5], 1
    %s394 = scalar_lea.sflag [#allocation5], 1
    %395 = vsyncpa %s394, 1

</llo_original>
